<compile_context>
chip_gen: v7x
topology: tpu7x:2x2x1
jax: 0.10.0
libtpu: 0.0.40
codegen_flags: <defaults>
</compile_context>

<pallas_src>
import functools
import math

import jax
import jax.numpy as jnp
import numpy as np
from jax.experimental import pallas as pl
from jax.experimental.pallas import tpu as pltpu


# ---------------------------------------------------------------------------
# Stage 1: fused QKV projection + RoPE.  grid = (B, S // ts)
# ---------------------------------------------------------------------------
def qkv_rope_kernel(x_ref, wqkv_ref, bqkv_ref, cos_ref, sin_ref,
                    q_ref, k_ref, v_ref, *, num_heads, head_dim):
    ts = x_ref.shape[1]
    D = num_heads * head_dim
    half = head_dim // 2

    xb = x_ref[0]                                                # (ts, D) bf16

    # One wide MXU matmul for q|k|v, f32 accumulation; f32 bias.
    qkv = jnp.dot(xb, wqkv_ref[...],
                  preferred_element_type=jnp.float32) + bqkv_ref[...]   # (ts, 3D)

    # --- RoPE on the lane-dense [q | k] slab, all heads at once -------------
    # Compact (ts, head_dim) tables replicated across the 2*H head slots once.
    cos = jnp.concatenate([cos_ref[...]] * (2 * num_heads), axis=-1)    # (ts, 2D)
    sin = jnp.concatenate([sin_ref[...]] * (2 * num_heads), axis=-1)    # signed sin
    qk = qkv[:, :2 * D]                                                 # (ts, 2D)

    # rotate_half within each head:
    #   first-half positions need  x[p + half]
    #   second-half positions need x[p - half]
    # Build both full-width lane rotations and select with an iota mask; the
    # cross-head wrap positions are never selected, so no table masking needed.
    # TODO(synk): replace the two concats with pltpu.roll (XLU slot) once the
    # rotate direction is pinned down for sub-128 lane widths.
    left = jnp.concatenate([qk[:, half:], qk[:, :half]], axis=-1)                   # x[p+half]
    right = jnp.concatenate([qk[:, 2 * D - half:], qk[:, :2 * D - half]], axis=-1)  # x[p-half]
    col = jax.lax.broadcasted_iota(jnp.int32, (ts, 2 * D), 1)
    first_half = (col % head_dim) < half
    qk = qk * cos + jnp.where(first_half, left, right) * sin

    def to_heads(slab):               # (ts, D) f32 -> (H, ts, hd) bf16
        t = slab.reshape(ts, num_heads, head_dim)
        return jnp.transpose(t, (1, 0, 2)).astype(jnp.bfloat16)

    q_ref[0] = to_heads(qk[:, :D])    # 1/sqrt(head_dim) already folded into W_q/b_q
    k_ref[0] = to_heads(qk[:, D:])
    v_ref[0] = to_heads(qkv[:, 2 * D:])


# ---------------------------------------------------------------------------
# Stage 2: flash attention (online softmax) + output projection.
# grid = (B, S // tq, S // tkv), kv axis last ("arbitrary").
# ---------------------------------------------------------------------------
def flash_attn_out_kernel(q_ref, k_ref, v_ref, wo_ref, bo_ref, o_ref,
                          m_sc, l_sc, acc_sc, *, num_heads, head_dim):
    D = num_heads * head_dim
    tq = q_ref.shape[2]

    @pl.when(pl.program_id(2) == 0)
    def _():
        m_sc[...] = jnp.full_like(m_sc, -jnp.inf)
        l_sc[...] = jnp.zeros_like(l_sc)
        acc_sc[...] = jnp.zeros_like(acc_sc)

    q = q_ref[0]                                                 # (H, tq, hd) bf16
    k = k_ref[0]                                                 # (H, tkv, hd)
    v = v_ref[0]                                                 # (H, tkv, hd)

    # Batched per-head QK^T (bf16 MXU, f32 scores). Scale pre-folded into q.
    s = jnp.einsum('hqd,hkd->hqk', q, k,
                   preferred_element_type=jnp.float32)           # (H, tq, tkv)

    m_prev = m_sc[...]
    m_new = jnp.maximum(m_prev, jnp.max(s, axis=-1, keepdims=True))
    alpha = jnp.exp(m_prev - m_new)
    p = jnp.exp(s - m_new)
    l_sc[...] = alpha * l_sc[...] + jnp.sum(p, axis=-1, keepdims=True)
    acc_sc[...] = alpha * acc_sc[...] + jnp.einsum(
        'hqk,hkd->hqd', p.astype(jnp.bfloat16), v,
        preferred_element_type=jnp.float32)
    m_sc[...] = m_new

    @pl.when(pl.program_id(2) == pl.num_programs(2) - 1)
    def _():
        ctx = (acc_sc[...] * pl.reciprocal(l_sc[...], approx=True)
               ).astype(jnp.bfloat16)                            # (H, tq, hd)
        # Fold the head-concat into the output projection: accumulate
        # per-head (tq,hd) @ (hd,D) MXU matmuls — no (H,S,hd)->(S,D) relayout.
        out = jnp.zeros((tq, D), jnp.float32)
        for h in range(num_heads):
            out = out + jnp.dot(ctx[h], wo_ref[h],
                                preferred_element_type=jnp.float32)
        o_ref[0] = out + bo_ref[...]


# ---------------------------------------------------------------------------
# Host-side helpers
# ---------------------------------------------------------------------------
def make_rope_tables(seq_len, head_dim):
    """Compact (S, head_dim) cos and signed-sin tables (no per-head tiling)."""
    half = head_dim // 2
    theta = 10000.0 ** (-2.0 * jnp.arange(0, half, dtype=jnp.float32) / head_dim)
    m = jnp.arange(seq_len, dtype=jnp.float32)
    freqs = jnp.outer(m, theta)                              # (S, hd//2)
    cos = jnp.repeat(jnp.cos(freqs), 2, axis=-1)             # (S, hd) [c0,c0,c1,c1,...]
    sin = jnp.repeat(jnp.sin(freqs), 2, axis=-1)             # (S, hd)
    j = jnp.arange(head_dim)
    sign = jnp.where(j < half, -1.0, 1.0)[None, :]           # -sin pairs with x[p+half]
    return cos.astype(jnp.float32), (sin * sign).astype(jnp.float32)


def _pick_tile(S, target):
    """Largest tile <= target that divides S (multiple of 8 when tiling)."""
    if S <= target:
        return S
    for t in range(target, 7, -8):
        if S % t == 0:
            return t
    return S


def mha_rope_forward(x, params, num_heads, *,
                     ts_target=256, tq_target=256, tkv_target=512):
    B, S, D = x.shape
    head_dim = D // num_heads
    wq, bq, wk, bk, wv, bv, wo, bo = params
    q_scale = 1.0 / math.sqrt(head_dim)

    # Host packing: scale folded into W_q/b_q (RoPE is linear, so this equals
    # scaling q after RoPE).  Weights bf16, biases f32.
    w_qkv = jnp.concatenate([wq.T * q_scale, wk.T, wv.T], axis=1).astype(jnp.bfloat16)
    b_qkv = jnp.concatenate([bq * q_scale, bk, bv]).reshape(1, 3 * D).astype(jnp.float32)
    wo_h = wo.T.reshape(num_heads, head_dim, D).astype(jnp.bfloat16)
    b_o = bo.reshape(1, D).astype(jnp.float32)
    cos_t, sin_t = make_rope_tables(S, head_dim)

    ts = _pick_tile(S, ts_target)
    tq = _pick_tile(S, tq_target)
    tkv = _pick_tile(S, tkv_target)

    # 48 MiB: below v7x's 64 MiB physical VMEM; raise to ~100 MiB on v5e/v6e.
    vmem_limit = 48 * 1024 * 1024

    # ---- Stage 1: fused QKV projection + RoPE ------------------------------
    qkv_kernel = functools.partial(qkv_rope_kernel,
                                   num_heads=num_heads, head_dim=head_dim)
    hqkv_spec = pl.BlockSpec((1, num_heads, ts, head_dim),
                             lambda b, s: (b, 0, s, 0))
    q_h, k_h, v_h = pl.pallas_call(
        qkv_kernel,
        out_shape=tuple(jax.ShapeDtypeStruct((B, num_heads, S, head_dim),
                                             jnp.bfloat16) for _ in range(3)),
        grid=(B, S // ts),
        in_specs=[
            pl.BlockSpec((1, ts, D), lambda b, s: (b, s, 0)),       # x (bf16)
            pl.BlockSpec((D, 3 * D), lambda b, s: (0, 0)),          # W_qkv (bf16)
            pl.BlockSpec((1, 3 * D), lambda b, s: (0, 0)),          # b_qkv (f32)
            pl.BlockSpec((ts, head_dim), lambda b, s: (s, 0)),      # cos (f32)
            pl.BlockSpec((ts, head_dim), lambda b, s: (s, 0)),      # signed sin (f32)
        ],
        out_specs=(hqkv_spec, hqkv_spec, hqkv_spec),
        compiler_params=pltpu.CompilerParams(
            dimension_semantics=("parallel", "parallel"),
            vmem_limit_bytes=vmem_limit),
    )(x.astype(jnp.bfloat16), w_qkv, b_qkv, cos_t, sin_t)

    # ---- Stage 2: flash attention + output projection ----------------------
    attn_kernel = functools.partial(flash_attn_out_kernel,
                                    num_heads=num_heads, head_dim=head_dim)
    out = pl.pallas_call(
        attn_kernel,
        out_shape=jax.ShapeDtypeStruct((B, S, D), jnp.float32),
        grid=(B, S // tq, S // tkv),
        in_specs=[
            pl.BlockSpec((1, num_heads, tq, head_dim),
                         lambda b, i, j: (b, 0, i, 0)),             # q
            pl.BlockSpec((1, num_heads, tkv, head_dim),
                         lambda b, i, j: (b, 0, j, 0)),             # k
            pl.BlockSpec((1, num_heads, tkv, head_dim),
                         lambda b, i, j: (b, 0, j, 0)),             # v
            pl.BlockSpec((num_heads, head_dim, D),
                         lambda b, i, j: (0, 0, 0)),                # W_o (per-head)
            pl.BlockSpec((1, D), lambda b, i, j: (0, 0)),           # b_o
        ],
        out_specs=pl.BlockSpec((1, tq, D), lambda b, i, j: (b, i, 0)),
        scratch_shapes=[
            pltpu.VMEM((num_heads, tq, 1), jnp.float32),            # m
            pltpu.VMEM((num_heads, tq, 1), jnp.float32),            # l
            pltpu.VMEM((num_heads, tq, head_dim), jnp.float32),     # acc
        ],
        compiler_params=pltpu.CompilerParams(
            dimension_semantics=("parallel", "parallel", "arbitrary"),
            vmem_limit_bytes=vmem_limit),
    )(q_h, k_h, v_h, wo_h, b_o)
    return out


# ---------------------------------------------------------------------------
# Pure-JAX f32 mirror of the PyTorch module (for verification)
# ---------------------------------------------------------------------------
def ref_forward(x, params, num_heads):
    B, S, D = x.shape
    hd = D // num_heads
    half = hd // 2
    wq, bq, wk, bk, wv, bv, wo, bo = params
    q = x @ wq.T + bq
    k = x @ wk.T + bk
    v = x @ wv.T + bv
    q = q.reshape(B, S, num_heads, hd).transpose(0, 2, 1, 3)
    k = k.reshape(B, S, num_heads, hd).transpose(0, 2, 1, 3)
    v = v.reshape(B, S, num_heads, hd).transpose(0, 2, 1, 3)
    theta = 10000.0 ** (-2.0 * jnp.arange(0, half, dtype=jnp.float32) / hd)
    freqs = jnp.outer(jnp.arange(S, dtype=jnp.float32), theta)
    cos = jnp.repeat(jnp.cos(freqs), 2, axis=-1)[None, None]
    sin = jnp.repeat(jnp.sin(freqs), 2, axis=-1)[None, None]

    def rot(t):
        return jnp.concatenate([-t[..., half:], t[..., :half]], axis=-1)

    q = q * cos + rot(q) * sin
    k = k * cos + rot(k) * sin
    scores = jnp.einsum('bhsd,bhtd->bhst', q, k) / math.sqrt(hd)
    attn = jax.nn.softmax(scores, axis=-1)
    out = jnp.einsum('bhst,bhtd->bhsd', attn, v)
    out = out.transpose(0, 2, 1, 3).reshape(B, S, D)
    return out @ wo.T + bo


if __name__ == "__main__":
    B, S, D, H = 2, 8, 32, 4  # batch, seq, d_model, num_heads -> head_dim = 8

    key = jax.random.PRNGKey(0)
    keys = jax.random.split(key, 9)
    scale = 1.0 / math.sqrt(D)
    wq = jax.random.uniform(keys[0], (D, D), jnp.float32, -scale, scale)
    bq = jax.random.uniform(keys[1], (D,), jnp.float32, -scale, scale)
    wk = jax.random.uniform(keys[2], (D, D), jnp.float32, -scale, scale)
    bk = jax.random.uniform(keys[3], (D,), jnp.float32, -scale, scale)
    wv = jax.random.uniform(keys[4], (D, D), jnp.float32, -scale, scale)
    bv = jax.random.uniform(keys[5], (D,), jnp.float32, -scale, scale)
    wo = jax.random.uniform(keys[6], (D, D), jnp.float32, -scale, scale)
    bo = jax.random.uniform(keys[7], (D,), jnp.float32, -scale, scale)
    params = (wq, bq, wk, bk, wv, bv, wo, bo)

    x = jax.random.normal(keys[8], (B, S, D), jnp.float32)

    out = jax.block_until_ready(mha_rope_forward(x, params, H))
    ref = jax.block_until_ready(ref_forward(x, params, H))

    # bf16-matmul kernel vs f32 reference -> bf16-level tolerance.
    np.testing.assert_allclose(np.asarray(out), np.asarray(ref),
                               rtol=5e-2, atol=5e-2)

    print("KERNEL_OK")
</pallas_src>

<mosaic_0001>
module attributes {stable_mosaic.version = 11 : i64} {
  func.func @qkv_rope_kernel(%arg0: i32, %arg1: i32, %arg2: memref<1x8x32xbf16, #tpu.memory_space<vmem>>, %arg3: memref<32x96xbf16, #tpu.memory_space<vmem>>, %arg4: memref<1x96xf32, #tpu.memory_space<vmem>>, %arg5: memref<8x8xf32, #tpu.memory_space<vmem>>, %arg6: memref<8x8xf32, #tpu.memory_space<vmem>>, %arg7: memref<1x4x8x8xbf16, #tpu.memory_space<vmem>>, %arg8: memref<1x4x8x8xbf16, #tpu.memory_space<vmem>>, %arg9: memref<1x4x8x8xbf16, #tpu.memory_space<vmem>>) attributes {dimension_semantics = [#tpu.dimension_semantics<parallel>, #tpu.dimension_semantics<parallel>], iteration_bounds = array<i64: 2, 1>, scalar_prefetch = 0 : i64, scratch_operands = 0 : i64, tpu.core_type = #tpu.core_type<tc>, window_params = [{transform_indices = @transform_0, window_bounds = array<i64: 1, 8, 32>}, {pipeline_mode = #tpu.pipeline_mode<synchronous>, transform_indices = @transform_1, window_bounds = array<i64: 32, 96>}, {pipeline_mode = #tpu.pipeline_mode<synchronous>, transform_indices = @transform_2, window_bounds = array<i64: 1, 96>}, {transform_indices = @transform_3, window_bounds = array<i64: 8, 8>}, {transform_indices = @transform_4, window_bounds = array<i64: 8, 8>}, {transform_indices = @transform_5, window_bounds = array<i64: 1, 4, 8, 8>}, {transform_indices = @transform_6, window_bounds = array<i64: 1, 4, 8, 8>}, {transform_indices = @transform_7, window_bounds = array<i64: 1, 4, 8, 8>}]} {
    %c0 = arith.constant 0 : index
    %c0_0 = arith.constant 0 : index
    %c0_1 = arith.constant 0 : index
    %0 = vector.load %arg2[%c0, %c0_0, %c0_1] : memref<1x8x32xbf16, #tpu.memory_space<vmem>>, vector<1x8x32xbf16>
    %1 = vector.shape_cast %0 : vector<1x8x32xbf16> to vector<8x32xbf16>
    %c0_2 = arith.constant 0 : index
    %c0_3 = arith.constant 0 : index
    %2 = vector.load %arg3[%c0_2, %c0_3] : memref<32x96xbf16, #tpu.memory_space<vmem>>, vector<32x96xbf16>
    %cst = arith.constant dense<0.000000e+00> : vector<8x96xf32>
    %3 = tpu.matmul %1, %2, %cst {dimension_numbers = #tpu.dot_dimension_numbers<[1], [0], [0], [1], [0, 0, 1, 1], [], []>} : vector<8x32xbf16>, vector<32x96xbf16>, vector<8x96xf32> -> vector<8x96xf32>
    %c0_4 = arith.constant 0 : index
    %c0_5 = arith.constant 0 : index
    %4 = vector.load %arg4[%c0_4, %c0_5] : memref<1x96xf32, #tpu.memory_space<vmem>>, vector<1x96xf32>
    %5 = vector.broadcast %4 : vector<1x96xf32> to vector<8x96xf32>
    %6 = arith.addf %3, %5 : vector<8x96xf32>
    %c0_6 = arith.constant 0 : index
    %c0_7 = arith.constant 0 : index
    %7 = vector.load %arg5[%c0_6, %c0_7] : memref<8x8xf32, #tpu.memory_space<vmem>>, vector<8x8xf32>
    %8 = tpu.concatenate %7, %7, %7, %7, %7, %7, %7, %7 in 1 : vector<8x8xf32>, vector<8x8xf32>, vector<8x8xf32>, vector<8x8xf32>, vector<8x8xf32>, vector<8x8xf32>, vector<8x8xf32>, vector<8x8xf32> -> vector<8x64xf32>
    %c0_8 = arith.constant 0 : index
    %c0_9 = arith.constant 0 : index
    %9 = vector.load %arg6[%c0_8, %c0_9] : memref<8x8xf32, #tpu.memory_space<vmem>>, vector<8x8xf32>
    %10 = tpu.concatenate %9, %9, %9, %9, %9, %9, %9, %9 in 1 : vector<8x8xf32>, vector<8x8xf32>, vector<8x8xf32>, vector<8x8xf32>, vector<8x8xf32>, vector<8x8xf32>, vector<8x8xf32>, vector<8x8xf32> -> vector<8x64xf32>
    %11 = vector.extract_strided_slice %6 {offsets = [0, 0], sizes = [8, 64], strides = [1, 1]} : vector<8x96xf32> to vector<8x64xf32>
    %12 = vector.extract_strided_slice %11 {offsets = [0, 4], sizes = [8, 60], strides = [1, 1]} : vector<8x64xf32> to vector<8x60xf32>
    %13 = vector.extract_strided_slice %11 {offsets = [0, 0], sizes = [8, 4], strides = [1, 1]} : vector<8x64xf32> to vector<8x4xf32>
    %14 = tpu.concatenate %12, %13 in 1 : vector<8x60xf32>, vector<8x4xf32> -> vector<8x64xf32>
    %15 = vector.extract_strided_slice %11 {offsets = [0, 60], sizes = [8, 4], strides = [1, 1]} : vector<8x64xf32> to vector<8x4xf32>
    %16 = vector.extract_strided_slice %11 {offsets = [0, 0], sizes = [8, 60], strides = [1, 1]} : vector<8x64xf32> to vector<8x60xf32>
    %17 = tpu.concatenate %15, %16 in 1 : vector<8x4xf32>, vector<8x60xf32> -> vector<8x64xf32>
    %18 = tpu.iota {dimensions = array<i32: 1>} : vector<8x64xi32>
    %c8_i32 = arith.constant 8 : i32
    %c0_i32 = arith.constant 0 : i32
    %19 = arith.cmpi eq, %c8_i32, %c0_i32 : i32
    %c1_i32 = arith.constant 1 : i32
    %20 = arith.select %19, %c1_i32, %c8_i32 : i32
    %21 = vector.broadcast %20 : i32 to vector<8x64xi32>
    %22 = arith.remsi %18, %21 : vector<8x64xi32>
    %c0_i32_10 = arith.constant 0 : i32
    %23 = vector.broadcast %c0_i32_10 : i32 to vector<8x64xi32>
    %24 = arith.cmpi ne, %22, %23 : vector<8x64xi32>
    %c0_i32_11 = arith.constant 0 : i32
    %25 = vector.broadcast %c0_i32_11 : i32 to vector<8x64xi32>
    %26 = arith.cmpi slt, %22, %25 : vector<8x64xi32>
    %c0_i32_12 = arith.constant 0 : i32
    %27 = arith.cmpi slt, %20, %c0_i32_12 : i32
    %28 = vector.broadcast %27 : i1 to vector<8x64xi1>
    %29 = vector.broadcast %28 : vector<8x64xi1> to vector<8x64xi1>
    %30 = arith.xori %26, %29 : vector<8x64xi1>
    %31 = arith.andi %30, %24 : vector<8x64xi1>
    %32 = vector.broadcast %20 : i32 to vector<8x64xi32>
    %33 = arith.addi %22, %32 : vector<8x64xi32>
    %34 = arith.select %31, %33, %22 : vector<8x64xi1>, vector<8x64xi32>
    %c4_i32 = arith.constant 4 : i32
    %35 = vector.broadcast %c4_i32 : i32 to vector<8x64xi32>
    %36 = arith.cmpi slt, %34, %35 : vector<8x64xi32>
    %37 = arith.mulf %11, %8 : vector<8x64xf32>
    %38 = arith.select %36, %14, %17 : vector<8x64xi1>, vector<8x64xf32>
    %39 = arith.mulf %38, %10 : vector<8x64xf32>
    %40 = arith.addf %37, %39 : vector<8x64xf32>
    %41 = vector.extract_strided_slice %40 {offsets = [0, 0], sizes = [8, 32], strides = [1, 1]} : vector<8x64xf32> to vector<8x32xf32>
    %42 = vector.shape_cast %41 : vector<8x32xf32> to vector<8x4x8xf32>
    %43 = tpu.transpose %42, [1, 0, 2] : vector<8x4x8xf32> -> vector<4x8x8xf32>
    %44 = arith.truncf %43 : vector<4x8x8xf32> to vector<4x8x8xbf16>
    %c0_13 = arith.constant 0 : index
    %c0_14 = arith.constant 0 : index
    %c0_15 = arith.constant 0 : index
    %c0_16 = arith.constant 0 : index
    %45 = vector.load %arg7[%c0_13, %c0_14, %c0_15, %c0_16] : memref<1x4x8x8xbf16, #tpu.memory_space<vmem>>, vector<1x4x8x8xbf16>
    %46 = vector.shape_cast %45 : vector<1x4x8x8xbf16> to vector<4x8x8xbf16>
    %47 = vector.shape_cast %44 : vector<4x8x8xbf16> to vector<1x4x8x8xbf16>
    tpu.vector_store %arg7[%c0_13, %c0_14, %c0_15, %c0_16], %47 {strides = array<i32>} : memref<1x4x8x8xbf16, #tpu.memory_space<vmem>>, vector<1x4x8x8xbf16>,
    %48 = vector.extract_strided_slice %40 {offsets = [0, 32], sizes = [8, 32], strides = [1, 1]} : vector<8x64xf32> to vector<8x32xf32>
    %49 = vector.shape_cast %48 : vector<8x32xf32> to vector<8x4x8xf32>
    %50 = tpu.transpose %49, [1, 0, 2] : vector<8x4x8xf32> -> vector<4x8x8xf32>
    %51 = arith.truncf %50 : vector<4x8x8xf32> to vector<4x8x8xbf16>
    %c0_17 = arith.constant 0 : index
    %c0_18 = arith.constant 0 : index
    %c0_19 = arith.constant 0 : index
    %c0_20 = arith.constant 0 : index
    %52 = vector.load %arg8[%c0_17, %c0_18, %c0_19, %c0_20] : memref<1x4x8x8xbf16, #tpu.memory_space<vmem>>, vector<1x4x8x8xbf16>
    %53 = vector.shape_cast %52 : vector<1x4x8x8xbf16> to vector<4x8x8xbf16>
    %54 = vector.shape_cast %51 : vector<4x8x8xbf16> to vector<1x4x8x8xbf16>
    tpu.vector_store %arg8[%c0_17, %c0_18, %c0_19, %c0_20], %54 {strides = array<i32>} : memref<1x4x8x8xbf16, #tpu.memory_space<vmem>>, vector<1x4x8x8xbf16>,
    %55 = vector.extract_strided_slice %6 {offsets = [0, 64], sizes = [8, 32], strides = [1, 1]} : vector<8x96xf32> to vector<8x32xf32>
    %56 = vector.shape_cast %55 : vector<8x32xf32> to vector<8x4x8xf32>
    %57 = tpu.transpose %56, [1, 0, 2] : vector<8x4x8xf32> -> vector<4x8x8xf32>
    %58 = arith.truncf %57 : vector<4x8x8xf32> to vector<4x8x8xbf16>
    %c0_21 = arith.constant 0 : index
    %c0_22 = arith.constant 0 : index
    %c0_23 = arith.constant 0 : index
    %c0_24 = arith.constant 0 : index
    %59 = vector.load %arg9[%c0_21, %c0_22, %c0_23, %c0_24] : memref<1x4x8x8xbf16, #tpu.memory_space<vmem>>, vector<1x4x8x8xbf16>
    %60 = vector.shape_cast %59 : vector<1x4x8x8xbf16> to vector<4x8x8xbf16>
    %61 = vector.shape_cast %58 : vector<4x8x8xbf16> to vector<1x4x8x8xbf16>
    tpu.vector_store %arg9[%c0_21, %c0_22, %c0_23, %c0_24], %61 {strides = array<i32>} : memref<1x4x8x8xbf16, #tpu.memory_space<vmem>>, vector<1x4x8x8xbf16>,
    return
  }
  func.func @transform_0(%arg0: i32, %arg1: i32) -> (i32, i32, i32) {
    %c0_i32 = arith.constant 0 : i32
    %c0_i32_0 = arith.constant 0 : i32
    return %arg0, %arg1, %c0_i32 : i32, i32, i32
  }
  func.func @transform_1(%arg0: i32, %arg1: i32) -> (i32, i32) {
    %c0_i32 = arith.constant 0 : i32
    %c0_i32_0 = arith.constant 0 : i32
    %c0_i32_1 = arith.constant 0 : i32
    return %c0_i32, %c0_i32_0 : i32, i32
  }
  func.func @transform_2(%arg0: i32, %arg1: i32) -> (i32, i32) {
    %c0_i32 = arith.constant 0 : i32
    %c0_i32_0 = arith.constant 0 : i32
    %c0_i32_1 = arith.constant 0 : i32
    return %c0_i32, %c0_i32_0 : i32, i32
  }
  func.func @transform_3(%arg0: i32, %arg1: i32) -> (i32, i32) {
    %c0_i32 = arith.constant 0 : i32
    %c0_i32_0 = arith.constant 0 : i32
    return %arg1, %c0_i32 : i32, i32
  }
  func.func @transform_4(%arg0: i32, %arg1: i32) -> (i32, i32) {
    %c0_i32 = arith.constant 0 : i32
    %c0_i32_0 = arith.constant 0 : i32
    return %arg1, %c0_i32 : i32, i32
  }
  func.func @transform_5(%arg0: i32, %arg1: i32) -> (i32, i32, i32, i32) {
    %c0_i32 = arith.constant 0 : i32
    %c0_i32_0 = arith.constant 0 : i32
    %c0_i32_1 = arith.constant 0 : i32
    return %arg0, %c0_i32, %arg1, %c0_i32_0 : i32, i32, i32, i32
  }
  func.func @transform_6(%arg0: i32, %arg1: i32) -> (i32, i32, i32, i32) {
    %c0_i32 = arith.constant 0 : i32
    %c0_i32_0 = arith.constant 0 : i32
    %c0_i32_1 = arith.constant 0 : i32
    return %arg0, %c0_i32, %arg1, %c0_i32_0 : i32, i32, i32, i32
  }
  func.func @transform_7(%arg0: i32, %arg1: i32) -> (i32, i32, i32, i32) {
    %c0_i32 = arith.constant 0 : i32
    %c0_i32_0 = arith.constant 0 : i32
    %c0_i32_1 = arith.constant 0 : i32
    return %arg0, %c0_i32, %arg1, %c0_i32_0 : i32, i32, i32, i32
  }
}

</mosaic_0001>

<llo_original>
// kernel: tpu_custom_call.1
$region0: #{tpu_custom_call.1}
  #allocation0 [shape = 'u32[]', space=smem, size = 0x4, offset = 0x4, fixed_abs, tag = 'smem constant byte address 0x4 - core index']
  #allocation1 [shape = 'u32[144,128]{1,0:T(1,128)}', space=vmem, size = 0x12000, scoped, tag = 'internal scratch']
  %s0 = inlined_call_operand.hbm [shape: bf16[2,8,32], index: 0, kind: input, shape index: {}]
  %s1 = inlined_call_operand.hbm [shape: bf16[32,96], index: 1, kind: input, shape index: {}]
  %s2 = inlined_call_operand.vmem [shape: f32[1,96], index: 2, kind: input, shape index: {}]
  %s3 = inlined_call_operand.vmem [shape: f32[8,8], index: 3, kind: input, shape index: {}]
  %s4 = inlined_call_operand.hbm [shape: f32[8,8], index: 4, kind: input, shape index: {}]
  %s5 = inlined_call_operand.hbm [shape: bf16[2,4,8,8], index: 5, kind: output, shape index: {0}]
  %s6 = inlined_call_operand.hbm [shape: bf16[2,4,8,8], index: 6, kind: output, shape index: {1}]
  %s7 = inlined_call_operand.hbm [shape: bf16[2,4,8,8], index: 7, kind: output, shape index: {2}]
  %8 = xla_tuple %s5, %s6, %s7
  %s9 = sld [smem:[#allocation0]]
  $region81: #{tpu_custom_call.1} parent=0
    _
  %s11 = ssub.s32 1, %s9
  %s12 = scalar_select 0, %s11, %s9
  $region1: #{tpu_custom_call.1} parent=0
    #allocation2 [shape = 'u8[4096]{0}', space=vmem, size = 0x1000, scoped, tag = 'input window, operand 0']
    #allocation3 [shape = 's32[2]{0}', space=sflag, size = 0x8, scoped, tag = 'scoped memory for tpu_custom_call.1']
    #allocation4 [shape = 's32[2]{0}', space=sflag, size = 0x8, scoped, tag = 'scoped memory for tpu_custom_call.1']
    #allocation5 [shape = 'u8[8192]{0}', space=vmem, size = 0x2000, scoped, tag = 'input window, operand 1, single buffered']
    #allocation6 [shape = 's32[1]{0}', space=sflag, size = 0x4, scoped, tag = 'scoped memory for tpu_custom_call.1']
    #allocation7 [shape = 'u8[4096]{0}', space=vmem, size = 0x1000, scoped, tag = 'input window, operand 4, single buffered']
    #allocation8 [shape = 'u8[16384]{0}', space=vmem, size = 0x4000, scoped, tag = 'output window, operand 0']
    #allocation9 [shape = 'u8[16384]{0}', space=vmem, size = 0x4000, scoped, tag = 'output window, operand 1']
    #allocation10 [shape = 's32[2]{0}', space=sflag, size = 0x8, scoped, tag = 'scoped memory for tpu_custom_call.1']
    #allocation11 [shape = 'u8[16384]{0}', space=vmem, size = 0x4000, scoped, tag = 'output window, operand 2']
    %13 = vsyncpa [#allocation3], 0
    %s14 = scalar_lea.sflag [#allocation3], 1
    %15 = vsyncpa %s14, 0
    %16 = vsyncpa [#allocation6], 0
    %17 = vsyncpa [#allocation4], 0
    %s18 = scalar_lea.sflag [#allocation4], 1
    %19 = vsyncpa %s18, 0
    %20 = vsyncpa [#allocation10], 0
    %s21 = scalar_lea.sflag [#allocation10], 1
    %22 = vsyncpa %s21, 0
    loop: start=0, step=1, limit=4
    $region2: #{tpu_custom_call.1} parent=1 // loop_pre_header
      _
    $region3: #{tpu_custom_call.1} parent=1 // loop_header
      %s24 = sphi 0, %s28
      %p25 = scmp.ge.s32.totalorder %s24, 4
      %s31 = sphi 0, %s43
      %s32 = sphi 0, %s39
      %s33 = sphi 0, %s31
      %s34 = sphi 0, %s32
      %s35 = sphi 0, %s33
      %s36 = sphi 0, %s34
      %s48 = sphi 0, %s50
      %s51 = sphi 0, %s48
      %s52 = sphi 0, %s51
      %s68 = sphi 0, %s52
      %s72 = sphi 0, %s72
      %s74 = sphi 0, %s72
      %s75 = sphi 0, %s74
      %s89 = sphi 0, %s75
      %s93 = sphi 0, %s93
      %s95 = sphi 0, %s93
      %s96 = sphi 0, %s95
      %s110 = sphi 0, %s96
      %s116 = sphi 0, %s118
      %s119 = sphi 0, %s116
      %s120 = sphi 0, %s119
      %s136 = sphi 0, %s120
      %s142 = sphi 0, %s144
      %s145 = sphi 0, %s142
      %s146 = sphi 0, %s145
      %s162 = sphi 0, %s146
      %s170 = sphi 0, %s172
      %s173 = sphi 0, %s170
      %s174 = sphi 0, %s173
      %s190 = sphi 0, %s174
      %s198 = sphi 0, %s200
      %s201 = sphi 0, %s198
      %s202 = sphi 0, %s201
      %s218 = sphi 0, %s202
      %s226 = sphi 0, %s228
      %s229 = sphi 0, %s226
      %s230 = sphi 0, %s229
      %s246 = sphi 0, %s230
    $region4: #{tpu_custom_call.1} parent=1 // loop_header_branch
      %27 = sbr.rel (%p25) target = $region8
    $region5: #{tpu_custom_call.1} parent=1 // loop_body
      %s29 = ssub.s32 %s24, 1
      %s30 = ssub.s32 %s24, 2
      %s37 = sadd.s32 1, %s32
      %p38 = scmp.ge.s32.totalorder %s37, 1
      %s39 = scalar_select %p38, 0, %s37
      %s40 = sadd.s32 1, %s31
      %s41 = scalar_select %p38, %s40, %s31
      %p42 = scmp.ge.s32.totalorder %s41, 2
      %s43 = scalar_select %p42, 0, %s41
      %s44 = ssub.s32 %s31, %s43
      %s45 = ssub.s32 %s32, %s39
      %s46 = sor.u32 %s44, %s45
      %p47 = scmp.eq.s32.totalorder %s46, 0
      %s49 = sadd.s32 %s48, 1
      %s50 = scalar_select %p47, %s48, %s49
      %p53 = pneg %p47
      %p54 = scmp.eq.s32.totalorder %s24, 1
      %p55 = por %p53, %p54
      %p56 = scmp.ne.s32.totalorder %s48, %s51
      %p57 = scmp.eq.s32.totalorder %s24, 0
      %p58 = por %p56, %p57
      %p59 = scmp.ne.s32.totalorder %s48, %s51
      %p60 = scmp.eq.s32.totalorder %s29, 1
      %p61 = por %p59, %p60
      %p62 = scmp.ne.s32.totalorder %s51, %s52
      %p63 = scmp.eq.s32.totalorder %s29, 0
      %p64 = por %p62, %p63
      %p65 = scmp.ne.s32.totalorder %s51, %s52
      %p66 = scmp.eq.s32.totalorder %s30, 1
      %p67 = por %p65, %p66
      %p69 = scmp.ne.s32.totalorder %s52, %s68
      %p70 = scmp.eq.s32.totalorder %s30, 0
      %p71 = por %p69, %p70
      %s73 = sadd.s32 %s72, 1
      %p76 = scmp.eq.s32.totalorder %s24, 1
      %p77 = scmp.ne.s32.totalorder %s72, %s74
      %p78 = scmp.eq.s32.totalorder %s24, 0
      %p79 = por %p77, %p78
      %p80 = scmp.ne.s32.totalorder %s72, %s74
      %p81 = scmp.eq.s32.totalorder %s29, 1
      %p82 = por %p80, %p81
      %p83 = scmp.ne.s32.totalorder %s74, %s75
      %p84 = scmp.eq.s32.totalorder %s29, 0
      %p85 = por %p83, %p84
      %p86 = scmp.ne.s32.totalorder %s74, %s75
      %p87 = scmp.eq.s32.totalorder %s30, 1
      %p88 = por %p86, %p87
      %p90 = scmp.ne.s32.totalorder %s75, %s89
      %p91 = scmp.eq.s32.totalorder %s30, 0
      %p92 = por %p90, %p91
      %s94 = sadd.s32 %s93, 1
      %p97 = scmp.eq.s32.totalorder %s24, 1
      %p98 = scmp.ne.s32.totalorder %s93, %s95
      %p99 = scmp.eq.s32.totalorder %s24, 0
      %p100 = por %p98, %p99
      %p101 = scmp.ne.s32.totalorder %s93, %s95
      %p102 = scmp.eq.s32.totalorder %s29, 1
      %p103 = por %p101, %p102
      %p104 = scmp.ne.s32.totalorder %s95, %s96
      %p105 = scmp.eq.s32.totalorder %s29, 0
      %p106 = por %p104, %p105
      %p107 = scmp.ne.s32.totalorder %s95, %s96
      %p108 = scmp.eq.s32.totalorder %s30, 1
      %p109 = por %p107, %p108
      %p111 = scmp.ne.s32.totalorder %s96, %s110
      %p112 = scmp.eq.s32.totalorder %s30, 0
      %p113 = por %p111, %p112
      %s114 = ssub.s32 %s32, %s39
      %p115 = scmp.eq.s32.totalorder %s114, 0
      %s117 = sadd.s32 %s116, 1
      %s118 = scalar_select %p115, %s116, %s117
      %p121 = pneg %p115
      %p122 = scmp.eq.s32.totalorder %s24, 1
      %p123 = por %p121, %p122
      %p124 = scmp.ne.s32.totalorder %s116, %s119
      %p125 = scmp.eq.s32.totalorder %s24, 0
      %p126 = por %p124, %p125
      %p127 = scmp.ne.s32.totalorder %s116, %s119
      %p128 = scmp.eq.s32.totalorder %s29, 1
      %p129 = por %p127, %p128
      %p130 = scmp.ne.s32.totalorder %s119, %s120
      %p131 = scmp.eq.s32.totalorder %s29, 0
      %p132 = por %p130, %p131
      %p133 = scmp.ne.s32.totalorder %s119, %s120
      %p134 = scmp.eq.s32.totalorder %s30, 1
      %p135 = por %p133, %p134
      %p137 = scmp.ne.s32.totalorder %s120, %s136
      %p138 = scmp.eq.s32.totalorder %s30, 0
      %p139 = por %p137, %p138
      %s140 = ssub.s32 %s32, %s39
      %p141 = scmp.eq.s32.totalorder %s140, 0
      %s143 = sadd.s32 %s142, 1
      %s144 = scalar_select %p141, %s142, %s143
      %p147 = pneg %p141
      %p148 = scmp.eq.s32.totalorder %s24, 1
      %p149 = por %p147, %p148
      %p150 = scmp.ne.s32.totalorder %s142, %s145
      %p151 = scmp.eq.s32.totalorder %s24, 0
      %p152 = por %p150, %p151
      %p153 = scmp.ne.s32.totalorder %s142, %s145
      %p154 = scmp.eq.s32.totalorder %s29, 1
      %p155 = por %p153, %p154
      %p156 = scmp.ne.s32.totalorder %s145, %s146
      %p157 = scmp.eq.s32.totalorder %s29, 0
      %p158 = por %p156, %p157
      %p159 = scmp.ne.s32.totalorder %s145, %s146
      %p160 = scmp.eq.s32.totalorder %s30, 1
      %p161 = por %p159, %p160
      %p163 = scmp.ne.s32.totalorder %s146, %s162
      %p164 = scmp.eq.s32.totalorder %s30, 0
      %p165 = por %p163, %p164
      %s166 = ssub.s32 %s31, %s43
      %s167 = ssub.s32 %s32, %s39
      %s168 = sor.u32 %s166, %s167
      %p169 = scmp.eq.s32.totalorder %s168, 0
      %s171 = sadd.s32 %s170, 1
      %s172 = scalar_select %p169, %s170, %s171
      %p175 = pneg %p169
      %p176 = scmp.eq.s32.totalorder %s24, 1
      %p177 = por %p175, %p176
      %p178 = scmp.ne.s32.totalorder %s170, %s173
      %p179 = scmp.eq.s32.totalorder %s24, 0
      %p180 = por %p178, %p179
      %p181 = scmp.ne.s32.totalorder %s170, %s173
      %p182 = scmp.eq.s32.totalorder %s29, 1
      %p183 = por %p181, %p182
      %p184 = scmp.ne.s32.totalorder %s173, %s174
      %p185 = scmp.eq.s32.totalorder %s29, 0
      %p186 = por %p184, %p185
      %p187 = scmp.ne.s32.totalorder %s173, %s174
      %p188 = scmp.eq.s32.totalorder %s30, 1
      %p189 = por %p187, %p188
      %p191 = scmp.ne.s32.totalorder %s174, %s190
      %p192 = scmp.eq.s32.totalorder %s30, 0
      %p193 = por %p191, %p192
      %s194 = ssub.s32 %s31, %s43
      %s195 = ssub.s32 %s32, %s39
      %s196 = sor.u32 %s194, %s195
      %p197 = scmp.eq.s32.totalorder %s196, 0
      %s199 = sadd.s32 %s198, 1
      %s200 = scalar_select %p197, %s198, %s199
      %p203 = pneg %p197
      %p204 = scmp.eq.s32.totalorder %s24, 1
      %p205 = por %p203, %p204
      %p206 = scmp.ne.s32.totalorder %s198, %s201
      %p207 = scmp.eq.s32.totalorder %s24, 0
      %p208 = por %p206, %p207
      %p209 = scmp.ne.s32.totalorder %s198, %s201
      %p210 = scmp.eq.s32.totalorder %s29, 1
      %p211 = por %p209, %p210
      %p212 = scmp.ne.s32.totalorder %s201, %s202
      %p213 = scmp.eq.s32.totalorder %s29, 0
      %p214 = por %p212, %p213
      %p215 = scmp.ne.s32.totalorder %s201, %s202
      %p216 = scmp.eq.s32.totalorder %s30, 1
      %p217 = por %p215, %p216
      %p219 = scmp.ne.s32.totalorder %s202, %s218
      %p220 = scmp.eq.s32.totalorder %s30, 0
      %p221 = por %p219, %p220
      %s222 = ssub.s32 %s31, %s43
      %s223 = ssub.s32 %s32, %s39
      %s224 = sor.u32 %s222, %s223
      %p225 = scmp.eq.s32.totalorder %s224, 0
      %s227 = sadd.s32 %s226, 1
      %s228 = scalar_select %p225, %s226, %s227
      %p231 = pneg %p225
      %p232 = scmp.eq.s32.totalorder %s24, 1
      %p233 = por %p231, %p232
      %p234 = scmp.ne.s32.totalorder %s226, %s229
      %p235 = scmp.eq.s32.totalorder %s24, 0
      %p236 = por %p234, %p235
      %p237 = scmp.ne.s32.totalorder %s226, %s229
      %p238 = scmp.eq.s32.totalorder %s29, 1
      %p239 = por %p237, %p238
      %p240 = scmp.ne.s32.totalorder %s229, %s230
      %p241 = scmp.eq.s32.totalorder %s29, 0
      %p242 = por %p240, %p241
      %p243 = scmp.ne.s32.totalorder %s229, %s230
      %p244 = scmp.eq.s32.totalorder %s30, 1
      %p245 = por %p243, %p244
      %p247 = scmp.ne.s32.totalorder %s230, %s246
      %p248 = scmp.eq.s32.totalorder %s30, 0
      %p249 = por %p247, %p248
      %p250 = scmp.le.s32.totalorder 1, %s24
      %p251 = scmp.lt.s32.totalorder %s24, 3
      %p252 = pnand %p250, %p251
      %p253 = pneg %p252
      // Predicated region
      $region9: #{tpu_custom_call.1} parent=5 // pred_check
        _
      $region10: #{tpu_custom_call.1} parent=5 // pred_check_branch
        %255 = sbr.rel (%p252) target = $region12
      $region11: #{tpu_custom_call.1} parent=5 // pred_region
        %s256 = ssub.s32 %s24, 1
        // Predicated region
        $region13: #{tpu_custom_call.1} parent=11 // pred_check
          %p257 = pneg %p85
        $region14: #{tpu_custom_call.1} parent=11 // pred_check_branch
          %259 = sbr.rel (%p257) target = $region16
        $region15: #{tpu_custom_call.1} parent=11 // pred_region
          %s261 = ssub.s32 256, 256
          %262 = vsyncadd [#allocation6], %s261
          %s263 = sshll.u32 [#allocation5], 4
          %s264 = int_to_ptr.vmem [resolvable:$true] %s263
          %269 = dma.hbm_to_vmem [thread:$0]  %s1, 256, %s264, [#allocation6], 64, 64, 4
        $region16: #{tpu_custom_call.1} parent=11 // pred_fallthru
          _
        // Predicated region
        $region17: #{tpu_custom_call.1} parent=11 // pred_check
          %p270 = pneg %p106
        $region18: #{tpu_custom_call.1} parent=11 // pred_check_branch
          %272 = sbr.rel (%p270) target = $region20
        $region19: #{tpu_custom_call.1} parent=11 // pred_region
          _
        $region20: #{tpu_custom_call.1} parent=11 // pred_fallthru
          _
        // Predicated region
        $region21: #{tpu_custom_call.1} parent=11 // pred_check
          %p273 = pneg %p132
        $region22: #{tpu_custom_call.1} parent=11 // pred_check_branch
          %275 = sbr.rel (%p273) target = $region24
        $region23: #{tpu_custom_call.1} parent=11 // pred_region
          %p276 = scmp.lt.s32.totalorder %s34, 0
          %s277 = scalar_select %p276, %s34, 0
          %s278 = smul.addr %s277, 8
          %s279 = scalar_lea.vmem %s3, %s278
        $region24: #{tpu_custom_call.1} parent=11 // pred_fallthru
          _
        // Predicated region
        $region25: #{tpu_custom_call.1} parent=11 // pred_check
          %p280 = pneg %p158
        $region26: #{tpu_custom_call.1} parent=11 // pred_check_branch
          %282 = sbr.rel (%p280) target = $region28
        $region27: #{tpu_custom_call.1} parent=11 // pred_region
          %s284 = ssub.s32 128, 128
          %285 = vsyncadd [#allocation6], %s284
          %s286 = smul.addr %s34, 128
          %s287 = scalar_lea.hbm %s4, %s286
          %s289 = sshll.u32 [#allocation7], 4
          %s290 = int_to_ptr.vmem [resolvable:$true] %s289
          %292 = dma.hbm_to_vmem [thread:$0]  %s287, 128, %s290, [#allocation6]
        $region28: #{tpu_custom_call.1} parent=11 // pred_fallthru
          _
      $region12: #{tpu_custom_call.1} parent=5 // pred_fallthru
        _
      %p293 = scmp.lt.s32.totalorder %s24, 2
      // Predicated region
      $region29: #{tpu_custom_call.1} parent=5 // pred_check
        %p294 = pneg %p293
      $region30: #{tpu_custom_call.1} parent=5 // pred_check_branch
        %296 = sbr.rel (%p294) target = $region32
      $region31: #{tpu_custom_call.1} parent=5 // pred_region
        // Predicated region
        $region33: #{tpu_custom_call.1} parent=31 // pred_check
          %p297 = pneg %p58
        $region34: #{tpu_custom_call.1} parent=31 // pred_check_branch
          %299 = sbr.rel (%p297) target = $region36
        $region35: #{tpu_custom_call.1} parent=31 // pred_region
          %s300 = sand.u32 %s48, 1
          %s301 = scalar_lea.sflag [#allocation3], %s300
          %s302 = sand.u32 %s48, 1
          %s303 = smul.addr %s302, 4
          %s304 = scalar_lea.vmem [#allocation2], %s303
          %s306 = ssub.s32 64, 64
          %307 = vsyncadd %s301, %s306
          %s308 = sadd.s32 %s32, %s31
          %s309 = smul.addr %s308, 64
          %s310 = scalar_lea.hbm %s0, %s309
          %s312 = sshll.u32 %s304, 4
          %s313 = int_to_ptr.vmem [resolvable:$true] %s312
          %315 = dma.hbm_to_vmem [thread:$0]  %s310, 64, %s313, %s301
        $region36: #{tpu_custom_call.1} parent=31 // pred_fallthru
          _
      $region32: #{tpu_custom_call.1} parent=5 // pred_fallthru
        _
      %p316 = scmp.le.s32.totalorder 1, %s24
      %p317 = scmp.lt.s32.totalorder %s24, 3
      %p318 = pnand %p316, %p317
      %p319 = pneg %p318
      // Predicated region
      $region37: #{tpu_custom_call.1} parent=5 // pred_check
        _
      $region38: #{tpu_custom_call.1} parent=5 // pred_check_branch
        %321 = sbr.rel (%p318) target = $region40
      $region39: #{tpu_custom_call.1} parent=5 // pred_region
        %s322 = ssub.s32 %s24, 1
        %s323 = sand.u32 %s51, 1
        %s324 = scalar_lea.sflag [#allocation3], %s323
        %s325 = sand.u32 %s51, 1
        %s326 = smul.addr %s325, 4
        %s327 = scalar_lea.vmem [#allocation2], %s326
        // Predicated region
        $region41: #{tpu_custom_call.1} parent=39 // pred_check
          %p328 = pneg %p64
        $region42: #{tpu_custom_call.1} parent=39 // pred_check_branch
          %330 = sbr.rel (%p328) target = $region44
        $region43: #{tpu_custom_call.1} parent=39 // pred_region
          %331 = dma.done %s324, 64
        $region44: #{tpu_custom_call.1} parent=39 // pred_fallthru
          _
        // Predicated region
        $region45: #{tpu_custom_call.1} parent=39 // pred_check
          %p332 = pneg %p85
        $region46: #{tpu_custom_call.1} parent=39 // pred_check_branch
          %334 = sbr.rel (%p332) target = $region48
        $region47: #{tpu_custom_call.1} parent=39 // pred_region
          %335 = dma.done [#allocation6], 256
        $region48: #{tpu_custom_call.1} parent=39 // pred_fallthru
          _
        // Predicated region
        $region49: #{tpu_custom_call.1} parent=39 // pred_check
          %p336 = pneg %p158
        $region50: #{tpu_custom_call.1} parent=39 // pred_check_branch
          %338 = sbr.rel (%p336) target = $region52
        $region51: #{tpu_custom_call.1} parent=39 // pred_region
          %339 = dma.done [#allocation6], 128
        $region52: #{tpu_custom_call.1} parent=39 // pred_fallthru
          _
        %s340 = sand.u32 %s51, 1
        %s341 = scalar_lea.sflag [#allocation3], %s340
        %s342 = sand.u32 %s51, 1
        %s343 = smul.addr %s342, 4
        %s344 = scalar_lea.vmem [#allocation2], %s343
        %p345 = pneg %p64
        %p346 = pneg %p61
        %p347 = pneg %p85
        %p348 = pneg %p82
        %p349 = pneg %p106
        %p350 = pneg %p103
        %p351 = scmp.lt.s32.totalorder %s34, 0
        %s352 = scalar_select %p351, %s34, 0
        %s353 = smul.addr %s352, 8
        %s354 = scalar_lea.vmem %s3, %s353
        %p355 = pneg %p132
        %p356 = pneg %p129
        %p357 = pneg %p158
        %p358 = pneg %p155
        %p359 = pneg %p186
        %p360 = pneg %p183
        %s361 = sand.u32 %s173, 1
        %s362 = scalar_lea.sflag [#allocation4], %s361
        %s363 = sand.u32 %s173, 1
        %s364 = smul.addr %s363, 16
        %s365 = scalar_lea.vmem [#allocation8], %s364
        %p366 = pneg %p214
        %p367 = pneg %p211
        %s368 = sand.u32 %s29, 1
        %s369 = scalar_lea.sflag [#allocation10], %s368
        %s370 = sand.u32 %s201, 1
        %s371 = smul.addr %s370, 16
        %s372 = scalar_lea.vmem [#allocation9], %s371
        %p373 = pneg %p242
        %p374 = pneg %p239
        %s375 = sand.u32 %s29, 1
        %s376 = scalar_lea.sflag [#allocation10], %s375
        %s377 = sand.u32 %s229, 1
        %s378 = smul.addr %s377, 16
        %s379 = scalar_lea.vmem [#allocation11], %s378
        %p380 = scmp.lt.s32.totalorder %s34, 0
        %s381 = scalar_select %p380, %s34, 0
        %s382 = smul.addr %s381, 8
        %s383 = scalar_lea.vmem %s3, %s382
        %v385 = vld [vmem:[%s327] sm:$0xf]
        %v386 = vld [vmem:[#allocation5] sm:$0xf]
        %v387 = vld [vmem:[#allocation5 + $0x4] sm:$0xf]
        %v388 = vld [vmem:[#allocation5 + $0x8] sm:$0xf]
        %v389 = vld [vmem:[#allocation5 + $0xc] sm:$0xf]
        %v390 = vld [vmem:[%s2] sm:$0x1]
        %v392 = vlaneseq
        %v393 = vshrl.u32 %v392, 7
        %v394 = vsub.s32 0, %v393
        %v395 = vrot.slane %v390, %v394
        %v401 = vunpack.c.l.b16 %v386
        %v402 = vunpack.c.l.b16 %v387
        %v403 = vunpack.c.l.b16 %v388
        %v404 = vunpack.c.l.b16 %v389
        %v405 = vpack.c.b16 %v402, %v401
        %v406 = vpack.c.b16 %v404, %v403
        %vm409 = vcmask 261120
        %v411 = vsel %vm409, %v385, 0
        %413 = vmatprep.subr.bf16.mxu0 0
        %414 = vmatpush1.bf16.msra.mxu0 %v405
        %415 = vmatprep.subr.bf16.mxu0 0
        %416 = vmatpush1.bf16.msra.mxu0 %v406
        %417 = vmatprep.subr.bf16.mxu0 0
        %418 = vmatpush1.bf16.msra.mxu0 0
        %419 = vmatprep.subr.bf16.mxu0 0
        %420 = vmatpush1.bf16.msra.mxu0 0
        %421 = vmatprep.subr.bf16.mxu0 0
        %422 = vmatpush1.bf16.msra.mxu0 0
        %423 = vmatprep.subr.bf16.mxu0 0
        %424 = vmatpush1.bf16.msra.mxu0 0
        %425 = vmatprep.subr.bf16.mxu0 0
        %426 = vmatpush1.bf16.msra.mxu0 0
        %427 = vmatprep.subr.bf16.mxu0 0
        %428 = vmatpush1.bf16.msra.mxu0 0
        %429 = vmatprep.subr.bf16.mxu0 0
        %430 = vmatpush1.bf16.msra.mxu0 0
        %431 = vmatprep.subr.bf16.mxu0 0
        %432 = vmatpush1.bf16.msra.mxu0 0
        %433 = vmatprep.subr.bf16.mxu0 0
        %434 = vmatpush1.bf16.msra.mxu0 0
        %435 = vmatprep.subr.bf16.mxu0 0
        %436 = vmatpush1.bf16.msra.mxu0 0
        %437 = vmatprep.subr.bf16.mxu0 0
        %438 = vmatpush1.bf16.msra.mxu0 0
        %439 = vmatprep.subr.bf16.mxu0 0
        %440 = vmatpush1.bf16.msra.mxu0 0
        %441 = vmatprep.subr.bf16.mxu0 0
        %442 = vmatpush1.bf16.msra.mxu0 0
        %443 = vmatprep.subr.bf16.mxu0 0
        %444 = vmatpush1.bf16.msra.mxu0 0
        %445 = vmatprep.mubr.bf16.mxu0 0
        %446 = vmatmul.mubr.bf16.gmra.mrb[0].mxu0 %v411
        %v447 = vpop.f32.mrb[0].mxu0
        %v448 = vadd.f32 %v395, %v447
        %v449 = vpop.f32.mrb[0].mxu0
        %v450 = vpop.f32.mrb[0].mxu0
        %v451 = vpop.f32.mrb[0].mxu0
        %452 = vdwg.mxu0
        %v453 = vld [vmem:[%s383] sm:$0xff]
        %455 = vrot.lane.b32.xlu0 %v453, 8
        %v456 = vpop.permute.xlu0 %455
        %458 = vrot.lane.b32.xlu0 %v453, 16
        %v459 = vpop.permute.xlu0 %458
        %461 = vrot.lane.b32.xlu0 %v453, 24
        %v462 = vpop.permute.xlu0 %461
        %464 = vrot.lane.b32.xlu0 %v453, 32
        %v465 = vpop.permute.xlu0 %464
        %467 = vrot.lane.b32.xlu0 %v453, 40
        %v468 = vpop.permute.xlu0 %467
        %470 = vrot.lane.b32.xlu0 %v453, 48
        %v471 = vpop.permute.xlu0 %470
        %473 = vrot.lane.b32.xlu0 %v453, 56
        %v474 = vpop.permute.xlu0 %473
        %vm476 = vcmask 64512
        %v477 = vsel %vm476, %v453, %v456
        %vm478 = vcmask 130048
        %v479 = vsel %vm478, %v477, %v459
        %vm480 = vcmask 195584
        %v481 = vsel %vm480, %v479, %v462
        %v482 = vsel %vm409, %v481, %v465
        %vm483 = vcmask 326656
        %v484 = vsel %vm483, %v482, %v468
        %vm485 = vcmask 392192
        %v486 = vsel %vm485, %v484, %v471
        %vm487 = vcmask 457728
        %v488 = vsel %vm487, %v486, %v474
        %v489 = vld [vmem:[#allocation7] sm:$0xff]
        %491 = vrot.lane.b32.xlu0 %v489, 8
        %v492 = vpop.permute.xlu0 %491
        %494 = vrot.lane.b32.xlu0 %v489, 16
        %v495 = vpop.permute.xlu0 %494
        %497 = vrot.lane.b32.xlu0 %v489, 24
        %v498 = vpop.permute.xlu0 %497
        %500 = vrot.lane.b32.xlu0 %v489, 32
        %v501 = vpop.permute.xlu0 %500
        %503 = vrot.lane.b32.xlu0 %v489, 40
        %v504 = vpop.permute.xlu0 %503
        %506 = vrot.lane.b32.xlu0 %v489, 48
        %v507 = vpop.permute.xlu0 %506
        %509 = vrot.lane.b32.xlu0 %v489, 56
        %v510 = vpop.permute.xlu0 %509
        %v512 = vsel %vm476, %v489, %v492
        %v513 = vsel %vm478, %v512, %v495
        %v514 = vsel %vm480, %v513, %v498
        %v515 = vsel %vm409, %v514, %v501
        %v516 = vsel %vm483, %v515, %v504
        %v517 = vsel %vm485, %v516, %v507
        %v518 = vsel %vm487, %v517, %v510
        %520 = vrot.lane.b32.xlu0 %v448, 124
        %v521 = vpop.permute.xlu0 %520
        %523 = vrot.lane.b32.xlu0 %v448, 60
        %v524 = vpop.permute.xlu0 %523
        %vm526 = vcmask 490496
        %v527 = vsel %vm526, %v521, %v524
        %528 = vrot.lane.b32.xlu0 %v448, 68
        %v529 = vpop.permute.xlu0 %528
        %531 = vrot.lane.b32.xlu0 %v448, 4
        %v532 = vpop.permute.xlu0 %531
        %vm534 = vcmask 31744
        %v535 = vsel %vm534, %v529, %v532
        %v536 = vlaneseq
        %v537 = vand.u32 %v536, 127
        %vm538 = vcmp.lt.s32.totalorder %v537, 0
        %v539 = vsub.s32 0, %v537
        %v540 = vsel %vm538, %v539, %v537
        %v541 = vshrl.u32 %v540, 3
        %v542 = vand.u32 %v540, 7
        %v543 = vsub.s32 0, %v542
        %v544 = vsel %vm538, %v543, %v542
        %vm545 = vcmp.ne.s32.totalorder %v544, 0
        %vm546 = vcmp.lt.s32.totalorder %v544, 0
        %vm547 = vmand %vm546, %vm545
        %v548 = vadd.s32 %v544, 8
        %v549 = vsel %vm547, %v548, %v544
        %vm550 = vcmp.lt.s32.totalorder %v549, 4
        %v551 = vmul.f32 %v448, %v488
        %v552 = vsel %vm550, %v527, %v535
        %v553 = vmul.f32 %v552, %v518
        %v554 = vadd.f32 %v551, %v553
        %556 = vrot.lane.b32.xlu0 %v554, 120
        %v557 = vpop.permute.xlu0 %556
        %559 = vrot.lane.b32.xlu0 %v554, 112
        %v560 = vpop.permute.xlu0 %559
        %562 = vrot.lane.b32.xlu0 %v554, 104
        %v563 = vpop.permute.xlu0 %562
        %v565 = vcombine.low %v554, %v560
        %v566 = vcombine.high %v554, %v560
        %v568 = vunpack.c.l.s4 1983009808
        %v569 = vunpack.c.0.s8 %v568
        %v570 = vlaneseq
        %v571 = vshrl.u32 %v570, 7
        %v572 = vsub.s32 %v569, %v571
        %v573 = vrot.slane %v565, %v572
        %v575 = vunpack.c.l.s4 1983009808
        %v576 = vunpack.c.0.s8 %v575
        %v577 = vlaneseq
        %v578 = vshrl.u32 %v577, 7
        %v579 = vsub.s32 %v576, %v578
        %v580 = vrot.slane %v566, %v579
        %v581 = vcombine.low %v557, %v563
        %v582 = vcombine.high %v557, %v563
        %v584 = vunpack.c.l.s4 1983009808
        %v585 = vunpack.c.0.s8 %v584
        %v586 = vlaneseq
        %v587 = vshrl.u32 %v586, 7
        %v588 = vsub.s32 %v585, %v587
        %v589 = vrot.slane %v581, %v588
        %v591 = vunpack.c.l.s4 1983009808
        %v592 = vunpack.c.0.s8 %v591
        %v593 = vlaneseq
        %v594 = vshrl.u32 %v593, 7
        %v595 = vsub.s32 %v592, %v594
        %v596 = vrot.slane %v582, %v595
        %v597 = vcombine.low %v573, %v589
        %v598 = vcombine.high %v573, %v589
        %v600 = vunpack.c.l.s4 1934713408
        %v601 = vunpack.c.0.s8 %v600
        %v602 = vlaneseq
        %v603 = vshrl.u32 %v602, 7
        %v604 = vsub.s32 %v601, %v603
        %v605 = vrot.slane %v597, %v604
        %v607 = vunpack.c.l.s4 1934713408
        %v608 = vunpack.c.0.s8 %v607
        %v609 = vlaneseq
        %v610 = vshrl.u32 %v609, 7
        %v611 = vsub.s32 %v608, %v610
        %v612 = vrot.slane %v598, %v611
        %v613 = vcombine.low %v580, %v596
        %v614 = vcombine.high %v580, %v596
        %v616 = vunpack.c.l.s4 1934713408
        %v617 = vunpack.c.0.s8 %v616
        %v618 = vlaneseq
        %v619 = vshrl.u32 %v618, 7
        %v620 = vsub.s32 %v617, %v619
        %v621 = vrot.slane %v613, %v620
        %v623 = vunpack.c.l.s4 1934713408
        %v624 = vunpack.c.0.s8 %v623
        %v625 = vlaneseq
        %v626 = vshrl.u32 %v625, 7
        %v627 = vsub.s32 %v624, %v626
        %v628 = vrot.slane %v614, %v627
        %v629 = vcombine.high %v605, 0.0
        %v630 = vcombine.high %v612, 0.0
        %v631 = vcombine.high %v621, 0.0
        %v632 = vcombine.high %v628, 0.0
        %v633 = vcombine.low %v605, %v612
        %v635 = vunpack.c.l.s4 1983009808
        %v636 = vunpack.c.0.s8 %v635
        %v637 = vlaneseq
        %v638 = vshrl.u32 %v637, 7
        %v639 = vsub.s32 %v636, %v638
        %v640 = vrot.slane %v633, %v639
        %v641 = vcombine.low %v629, %v630
        %v643 = vunpack.c.l.s4 1983009808
        %v644 = vunpack.c.0.s8 %v643
        %v645 = vlaneseq
        %v646 = vshrl.u32 %v645, 7
        %v647 = vsub.s32 %v644, %v646
        %v648 = vrot.slane %v641, %v647
        %v649 = vcombine.low %v621, %v628
        %v651 = vunpack.c.l.s4 1983009808
        %v652 = vunpack.c.0.s8 %v651
        %v653 = vlaneseq
        %v654 = vshrl.u32 %v653, 7
        %v655 = vsub.s32 %v652, %v654
        %v656 = vrot.slane %v649, %v655
        %v657 = vcombine.low %v631, %v632
        %v659 = vunpack.c.l.s4 1983009808
        %v660 = vunpack.c.0.s8 %v659
        %v661 = vlaneseq
        %v662 = vshrl.u32 %v661, 7
        %v663 = vsub.s32 %v660, %v662
        %v664 = vrot.slane %v657, %v663
        %v665 = vcombine.low %v640, %v648
        %v666 = vcombine.high %v640, %v648
        %v668 = vunpack.c.l.s4 1934713408
        %v669 = vunpack.c.0.s8 %v668
        %v670 = vlaneseq
        %v671 = vshrl.u32 %v670, 7
        %v672 = vsub.s32 %v669, %v671
        %v673 = vrot.slane %v665, %v672
        %v675 = vunpack.c.l.s4 1934713408
        %v676 = vunpack.c.0.s8 %v675
        %v677 = vlaneseq
        %v678 = vshrl.u32 %v677, 7
        %v679 = vsub.s32 %v676, %v678
        %v680 = vrot.slane %v666, %v679
        %v681 = vcombine.low %v656, %v664
        %v682 = vcombine.high %v656, %v664
        %v684 = vunpack.c.l.s4 1934713408
        %v685 = vunpack.c.0.s8 %v684
        %v686 = vlaneseq
        %v687 = vshrl.u32 %v686, 7
        %v688 = vsub.s32 %v685, %v687
        %v689 = vrot.slane %v681, %v688
        %v691 = vunpack.c.l.s4 1934713408
        %v692 = vunpack.c.0.s8 %v691
        %v693 = vlaneseq
        %v694 = vshrl.u32 %v693, 7
        %v695 = vsub.s32 %v692, %v694
        %v696 = vrot.slane %v682, %v695
        %v697 = vcombine.low %v673, %v689
        %v698 = vcombine.high %v673, %v689
        %v699 = vcombine.low %v680, %v696
        %v700 = vcombine.high %v680, %v696
        %v701 = vpack.c.bf16 %v697, %v697
        %v702 = vpack.c.bf16 %v698, %v698
        %v703 = vpack.c.bf16 %v699, %v699
        %v704 = vpack.c.bf16 %v700, %v700
        %vm705 = vcmask 60416
        %706 = vst.msk [vmem:[%s365] sm:$0xf] %vm705, %v701
        %707 = vst.msk [vmem:[%s365 + $0x4] sm:$0xf] %vm705, %v702
        %708 = vst.msk [vmem:[%s365 + $0x8] sm:$0xf] %vm705, %v703
        %709 = vst.msk [vmem:[%s365 + $0xc] sm:$0xf] %vm705, %v704
        %710 = vrot.lane.b32.xlu0 %v554, 96
        %v711 = vpop.permute.xlu0 %710
        %712 = vrot.lane.b32.xlu0 %v557, 96
        %v713 = vpop.permute.xlu0 %712
        %714 = vrot.lane.b32.xlu0 %v560, 96
        %v715 = vpop.permute.xlu0 %714
        %716 = vrot.lane.b32.xlu0 %v563, 96
        %v717 = vpop.permute.xlu0 %716
        %v722 = vcombine.low %v711, %v715
        %v723 = vcombine.high %v711, %v715
        %v725 = vunpack.c.l.s4 1983009808
        %v726 = vunpack.c.0.s8 %v725
        %v727 = vlaneseq
        %v728 = vshrl.u32 %v727, 7
        %v729 = vsub.s32 %v726, %v728
        %v730 = vrot.slane %v722, %v729
        %v732 = vunpack.c.l.s4 1983009808
        %v733 = vunpack.c.0.s8 %v732
        %v734 = vlaneseq
        %v735 = vshrl.u32 %v734, 7
        %v736 = vsub.s32 %v733, %v735
        %v737 = vrot.slane %v723, %v736
        %v738 = vcombine.low %v713, %v717
        %v739 = vcombine.high %v713, %v717
        %v741 = vunpack.c.l.s4 1983009808
        %v742 = vunpack.c.0.s8 %v741
        %v743 = vlaneseq
        %v744 = vshrl.u32 %v743, 7
        %v745 = vsub.s32 %v742, %v744
        %v746 = vrot.slane %v738, %v745
        %v748 = vunpack.c.l.s4 1983009808
        %v749 = vunpack.c.0.s8 %v748
        %v750 = vlaneseq
        %v751 = vshrl.u32 %v750, 7
        %v752 = vsub.s32 %v749, %v751
        %v753 = vrot.slane %v739, %v752
        %v754 = vcombine.low %v730, %v746
        %v755 = vcombine.high %v730, %v746
        %v757 = vunpack.c.l.s4 1934713408
        %v758 = vunpack.c.0.s8 %v757
        %v759 = vlaneseq
        %v760 = vshrl.u32 %v759, 7
        %v761 = vsub.s32 %v758, %v760
        %v762 = vrot.slane %v754, %v761
        %v764 = vunpack.c.l.s4 1934713408
        %v765 = vunpack.c.0.s8 %v764
        %v766 = vlaneseq
        %v767 = vshrl.u32 %v766, 7
        %v768 = vsub.s32 %v765, %v767
        %v769 = vrot.slane %v755, %v768
        %v770 = vcombine.low %v737, %v753
        %v771 = vcombine.high %v737, %v753
        %v773 = vunpack.c.l.s4 1934713408
        %v774 = vunpack.c.0.s8 %v773
        %v775 = vlaneseq
        %v776 = vshrl.u32 %v775, 7
        %v777 = vsub.s32 %v774, %v776
        %v778 = vrot.slane %v770, %v777
        %v780 = vunpack.c.l.s4 1934713408
        %v781 = vunpack.c.0.s8 %v780
        %v782 = vlaneseq
        %v783 = vshrl.u32 %v782, 7
        %v784 = vsub.s32 %v781, %v783
        %v785 = vrot.slane %v771, %v784
        %v786 = vcombine.high %v762, 0.0
        %v787 = vcombine.high %v769, 0.0
        %v788 = vcombine.high %v778, 0.0
        %v789 = vcombine.high %v785, 0.0
        %v790 = vcombine.low %v762, %v769
        %v792 = vunpack.c.l.s4 1983009808
        %v793 = vunpack.c.0.s8 %v792
        %v794 = vlaneseq
        %v795 = vshrl.u32 %v794, 7
        %v796 = vsub.s32 %v793, %v795
        %v797 = vrot.slane %v790, %v796
        %v798 = vcombine.low %v786, %v787
        %v800 = vunpack.c.l.s4 1983009808
        %v801 = vunpack.c.0.s8 %v800
        %v802 = vlaneseq
        %v803 = vshrl.u32 %v802, 7
        %v804 = vsub.s32 %v801, %v803
        %v805 = vrot.slane %v798, %v804
        %v806 = vcombine.low %v778, %v785
        %v808 = vunpack.c.l.s4 1983009808
        %v809 = vunpack.c.0.s8 %v808
        %v810 = vlaneseq
        %v811 = vshrl.u32 %v810, 7
        %v812 = vsub.s32 %v809, %v811
        %v813 = vrot.slane %v806, %v812
        %v814 = vcombine.low %v788, %v789
        %v816 = vunpack.c.l.s4 1983009808
        %v817 = vunpack.c.0.s8 %v816
        %v818 = vlaneseq
        %v819 = vshrl.u32 %v818, 7
        %v820 = vsub.s32 %v817, %v819
        %v821 = vrot.slane %v814, %v820
        %v822 = vcombine.low %v797, %v805
        %v823 = vcombine.high %v797, %v805
        %v825 = vunpack.c.l.s4 1934713408
        %v826 = vunpack.c.0.s8 %v825
        %v827 = vlaneseq
        %v828 = vshrl.u32 %v827, 7
        %v829 = vsub.s32 %v826, %v828
        %v830 = vrot.slane %v822, %v829
        %v832 = vunpack.c.l.s4 1934713408
        %v833 = vunpack.c.0.s8 %v832
        %v834 = vlaneseq
        %v835 = vshrl.u32 %v834, 7
        %v836 = vsub.s32 %v833, %v835
        %v837 = vrot.slane %v823, %v836
        %v838 = vcombine.low %v813, %v821
        %v839 = vcombine.high %v813, %v821
        %v841 = vunpack.c.l.s4 1934713408
        %v842 = vunpack.c.0.s8 %v841
        %v843 = vlaneseq
        %v844 = vshrl.u32 %v843, 7
        %v845 = vsub.s32 %v842, %v844
        %v846 = vrot.slane %v838, %v845
        %v848 = vunpack.c.l.s4 1934713408
        %v849 = vunpack.c.0.s8 %v848
        %v850 = vlaneseq
        %v851 = vshrl.u32 %v850, 7
        %v852 = vsub.s32 %v849, %v851
        %v853 = vrot.slane %v839, %v852
        %v854 = vcombine.low %v830, %v846
        %v855 = vcombine.high %v830, %v846
        %v856 = vcombine.low %v837, %v853
        %v857 = vcombine.high %v837, %v853
        %v858 = vpack.c.bf16 %v854, %v854
        %v859 = vpack.c.bf16 %v855, %v855
        %v860 = vpack.c.bf16 %v856, %v856
        %v861 = vpack.c.bf16 %v857, %v857
        %862 = vst.msk [vmem:[%s372] sm:$0xf] %vm705, %v858
        %863 = vst.msk [vmem:[%s372 + $0x4] sm:$0xf] %vm705, %v859
        %864 = vst.msk [vmem:[%s372 + $0x8] sm:$0xf] %vm705, %v860
        %865 = vst.msk [vmem:[%s372 + $0xc] sm:$0xf] %vm705, %v861
        %866 = vrot.lane.b32.xlu0 %v448, 120
        %v867 = vpop.permute.xlu0 %866
        %868 = vrot.lane.b32.xlu0 %v448, 112
        %v869 = vpop.permute.xlu0 %868
        %870 = vrot.lane.b32.xlu0 %v448, 104
        %v871 = vpop.permute.xlu0 %870
        %872 = vrot.lane.b32.xlu0 %v448, 64
        %v873 = vpop.permute.xlu0 %872
        %874 = vrot.lane.b32.xlu0 %v867, 64
        %v875 = vpop.permute.xlu0 %874
        %876 = vrot.lane.b32.xlu0 %v869, 64
        %v877 = vpop.permute.xlu0 %876
        %878 = vrot.lane.b32.xlu0 %v871, 64
        %v879 = vpop.permute.xlu0 %878
        %v884 = vcombine.low %v873, %v877
        %v885 = vcombine.high %v873, %v877
        %v887 = vunpack.c.l.s4 1983009808
        %v888 = vunpack.c.0.s8 %v887
        %v889 = vlaneseq
        %v890 = vshrl.u32 %v889, 7
        %v891 = vsub.s32 %v888, %v890
        %v892 = vrot.slane %v884, %v891
        %v894 = vunpack.c.l.s4 1983009808
        %v895 = vunpack.c.0.s8 %v894
        %v896 = vlaneseq
        %v897 = vshrl.u32 %v896, 7
        %v898 = vsub.s32 %v895, %v897
        %v899 = vrot.slane %v885, %v898
        %v900 = vcombine.low %v875, %v879
        %v901 = vcombine.high %v875, %v879
        %v903 = vunpack.c.l.s4 1983009808
        %v904 = vunpack.c.0.s8 %v903
        %v905 = vlaneseq
        %v906 = vshrl.u32 %v905, 7
        %v907 = vsub.s32 %v904, %v906
        %v908 = vrot.slane %v900, %v907
        %v910 = vunpack.c.l.s4 1983009808
        %v911 = vunpack.c.0.s8 %v910
        %v912 = vlaneseq
        %v913 = vshrl.u32 %v912, 7
        %v914 = vsub.s32 %v911, %v913
        %v915 = vrot.slane %v901, %v914
        %v916 = vcombine.low %v892, %v908
        %v917 = vcombine.high %v892, %v908
        %v919 = vunpack.c.l.s4 1934713408
        %v920 = vunpack.c.0.s8 %v919
        %v921 = vlaneseq
        %v922 = vshrl.u32 %v921, 7
        %v923 = vsub.s32 %v920, %v922
        %v924 = vrot.slane %v916, %v923
        %v926 = vunpack.c.l.s4 1934713408
        %v927 = vunpack.c.0.s8 %v926
        %v928 = vlaneseq
        %v929 = vshrl.u32 %v928, 7
        %v930 = vsub.s32 %v927, %v929
        %v931 = vrot.slane %v917, %v930
        %v932 = vcombine.low %v899, %v915
        %v933 = vcombine.high %v899, %v915
        %v935 = vunpack.c.l.s4 1934713408
        %v936 = vunpack.c.0.s8 %v935
        %v937 = vlaneseq
        %v938 = vshrl.u32 %v937, 7
        %v939 = vsub.s32 %v936, %v938
        %v940 = vrot.slane %v932, %v939
        %v942 = vunpack.c.l.s4 1934713408
        %v943 = vunpack.c.0.s8 %v942
        %v944 = vlaneseq
        %v945 = vshrl.u32 %v944, 7
        %v946 = vsub.s32 %v943, %v945
        %v947 = vrot.slane %v933, %v946
        %v948 = vcombine.high %v924, 0.0
        %v949 = vcombine.high %v931, 0.0
        %v950 = vcombine.high %v940, 0.0
        %v951 = vcombine.high %v947, 0.0
        %v952 = vcombine.low %v924, %v931
        %v954 = vunpack.c.l.s4 1983009808
        %v955 = vunpack.c.0.s8 %v954
        %v956 = vlaneseq
        %v957 = vshrl.u32 %v956, 7
        %v958 = vsub.s32 %v955, %v957
        %v959 = vrot.slane %v952, %v958
        %v960 = vcombine.low %v948, %v949
        %v962 = vunpack.c.l.s4 1983009808
        %v963 = vunpack.c.0.s8 %v962
        %v964 = vlaneseq
        %v965 = vshrl.u32 %v964, 7
        %v966 = vsub.s32 %v963, %v965
        %v967 = vrot.slane %v960, %v966
        %v968 = vcombine.low %v940, %v947
        %v970 = vunpack.c.l.s4 1983009808
        %v971 = vunpack.c.0.s8 %v970
        %v972 = vlaneseq
        %v973 = vshrl.u32 %v972, 7
        %v974 = vsub.s32 %v971, %v973
        %v975 = vrot.slane %v968, %v974
        %v976 = vcombine.low %v950, %v951
        %v978 = vunpack.c.l.s4 1983009808
        %v979 = vunpack.c.0.s8 %v978
        %v980 = vlaneseq
        %v981 = vshrl.u32 %v980, 7
        %v982 = vsub.s32 %v979, %v981
        %v983 = vrot.slane %v976, %v982
        %v984 = vcombine.low %v959, %v967
        %v985 = vcombine.high %v959, %v967
        %v987 = vunpack.c.l.s4 1934713408
        %v988 = vunpack.c.0.s8 %v987
        %v989 = vlaneseq
        %v990 = vshrl.u32 %v989, 7
        %v991 = vsub.s32 %v988, %v990
        %v992 = vrot.slane %v984, %v991
        %v994 = vunpack.c.l.s4 1934713408
        %v995 = vunpack.c.0.s8 %v994
        %v996 = vlaneseq
        %v997 = vshrl.u32 %v996, 7
        %v998 = vsub.s32 %v995, %v997
        %v999 = vrot.slane %v985, %v998
        %v1000 = vcombine.low %v975, %v983
        %v1001 = vcombine.high %v975, %v983
        %v1003 = vunpack.c.l.s4 1934713408
        %v1004 = vunpack.c.0.s8 %v1003
        %v1005 = vlaneseq
        %v1006 = vshrl.u32 %v1005, 7
        %v1007 = vsub.s32 %v1004, %v1006
        %v1008 = vrot.slane %v1000, %v1007
        %v1010 = vunpack.c.l.s4 1934713408
        %v1011 = vunpack.c.0.s8 %v1010
        %v1012 = vlaneseq
        %v1013 = vshrl.u32 %v1012, 7
        %v1014 = vsub.s32 %v1011, %v1013
        %v1015 = vrot.slane %v1001, %v1014
        %v1016 = vcombine.low %v992, %v1008
        %v1017 = vcombine.high %v992, %v1008
        %v1018 = vcombine.low %v999, %v1015
        %v1019 = vcombine.high %v999, %v1015
        %v1020 = vpack.c.bf16 %v1016, %v1016
        %v1021 = vpack.c.bf16 %v1017, %v1017
        %v1022 = vpack.c.bf16 %v1018, %v1018
        %v1023 = vpack.c.bf16 %v1019, %v1019
        %1024 = vst.msk [vmem:[%s379] sm:$0xf] %vm705, %v1020
        %1025 = vst.msk [vmem:[%s379 + $0x4] sm:$0xf] %vm705, %v1021
        %1026 = vst.msk [vmem:[%s379 + $0x8] sm:$0xf] %vm705, %v1022
        %1027 = vst.msk [vmem:[%s379 + $0xc] sm:$0xf] %vm705, %v1023
        %s1028 = sand.u32 %s173, 1
        %s1029 = scalar_lea.sflag [#allocation4], %s1028
        %s1030 = sand.u32 %s173, 1
        %s1031 = smul.addr %s1030, 16
        %s1032 = scalar_lea.vmem [#allocation8], %s1031
        %s1033 = sand.u32 %s29, 1
        %s1034 = scalar_lea.sflag [#allocation10], %s1033
        %s1035 = sand.u32 %s201, 1
        %s1036 = smul.addr %s1035, 16
        %s1037 = scalar_lea.vmem [#allocation9], %s1036
        %s1038 = sand.u32 %s29, 1
        %s1039 = scalar_lea.sflag [#allocation10], %s1038
        %s1040 = sand.u32 %s229, 1
        %s1041 = smul.addr %s1040, 16
        %s1042 = scalar_lea.vmem [#allocation11], %s1041
        // Predicated region
        $region53: #{tpu_custom_call.1} parent=39 // pred_check
          %p1043 = pneg %p183
        $region54: #{tpu_custom_call.1} parent=39 // pred_check_branch
          %1045 = sbr.rel (%p1043) target = $region56
        $region55: #{tpu_custom_call.1} parent=39 // pred_region
          %s1047 = ssub.s32 256, 256
          %1048 = vsyncadd %s1029, %s1047
          %s1049 = smul.addr %s33, 4
          %s1050 = sadd.s32 %s34, %s1049
          %s1051 = smul.addr %s1050, 64
          %s1052 = scalar_lea.hbm %s5, %s1051
          %s1053 = sshll.u32 %s1032, 4
          %s1054 = int_to_ptr.vmem [resolvable:$true] %s1053
          %1059 = dma.vmem_to_hbm [thread:$0]  %s1054, 256, %s1052, %s1029, 64, 64, 4
        $region56: #{tpu_custom_call.1} parent=39 // pred_fallthru
          _
        // Predicated region
        $region57: #{tpu_custom_call.1} parent=39 // pred_check
          %p1060 = pneg %p211
        $region58: #{tpu_custom_call.1} parent=39 // pred_check_branch
          %1062 = sbr.rel (%p1060) target = $region60
        $region59: #{tpu_custom_call.1} parent=39 // pred_region
          %s1064 = ssub.s32 256, 256
          %1065 = vsyncadd %s1034, %s1064
          %s1066 = smul.addr %s33, 4
          %s1067 = sadd.s32 %s34, %s1066
          %s1068 = smul.addr %s1067, 64
          %s1069 = scalar_lea.hbm %s6, %s1068
          %s1070 = sshll.u32 %s1037, 4
          %s1071 = int_to_ptr.vmem [resolvable:$true] %s1070
          %1076 = dma.vmem_to_hbm [thread:$0]  %s1071, 256, %s1069, %s1034, 64, 64, 4
        $region60: #{tpu_custom_call.1} parent=39 // pred_fallthru
          _
        // Predicated region
        $region61: #{tpu_custom_call.1} parent=39 // pred_check
          %p1077 = pneg %p239
        $region62: #{tpu_custom_call.1} parent=39 // pred_check_branch
          %1079 = sbr.rel (%p1077) target = $region64
        $region63: #{tpu_custom_call.1} parent=39 // pred_region
          %s1081 = ssub.s32 256, 256
          %1082 = vsyncadd %s1039, %s1081
          %s1083 = smul.addr %s33, 4
          %s1084 = sadd.s32 %s34, %s1083
          %s1085 = smul.addr %s1084, 64
          %s1086 = scalar_lea.hbm %s7, %s1085
          %s1087 = sshll.u32 %s1042, 4
          %s1088 = int_to_ptr.vmem [resolvable:$true] %s1087
          %1093 = dma.vmem_to_hbm [thread:$0]  %s1088, 256, %s1086, %s1039, 64, 64, 4
        $region64: #{tpu_custom_call.1} parent=39 // pred_fallthru
          _
      $region40: #{tpu_custom_call.1} parent=5 // pred_fallthru
        _
      %p1094 = scmp.le.s32.totalorder 2, %s24
      // Predicated region
      $region65: #{tpu_custom_call.1} parent=5 // pred_check
        %p1095 = pneg %p1094
      $region66: #{tpu_custom_call.1} parent=5 // pred_check_branch
        %1097 = sbr.rel (%p1095) target = $region68
      $region67: #{tpu_custom_call.1} parent=5 // pred_region
        %s1098 = ssub.s32 %s24, 2
        // Predicated region
        $region69: #{tpu_custom_call.1} parent=67 // pred_check
          %p1099 = pneg %p189
        $region70: #{tpu_custom_call.1} parent=67 // pred_check_branch
          %1101 = sbr.rel (%p1099) target = $region72
        $region71: #{tpu_custom_call.1} parent=67 // pred_region
          %s1102 = sand.u32 %s174, 1
          %s1103 = scalar_lea.sflag [#allocation4], %s1102
          %s1104 = sand.u32 %s174, 1
          %s1105 = smul.addr %s1104, 16
          %s1106 = scalar_lea.vmem [#allocation8], %s1105
          %1107 = dma.done %s1103, 256
        $region72: #{tpu_custom_call.1} parent=67 // pred_fallthru
          _
        // Predicated region
        $region73: #{tpu_custom_call.1} parent=67 // pred_check
          %p1108 = pneg %p217
        $region74: #{tpu_custom_call.1} parent=67 // pred_check_branch
          %1110 = sbr.rel (%p1108) target = $region76
        $region75: #{tpu_custom_call.1} parent=67 // pred_region
          %s1111 = sand.u32 %s30, 1
          %s1112 = scalar_lea.sflag [#allocation10], %s1111
          %s1113 = sand.u32 %s202, 1
          %s1114 = smul.addr %s1113, 16
          %s1115 = scalar_lea.vmem [#allocation9], %s1114
          %1116 = dma.done %s1112, 256
        $region76: #{tpu_custom_call.1} parent=67 // pred_fallthru
          _
        // Predicated region
        $region77: #{tpu_custom_call.1} parent=67 // pred_check
          %p1117 = pneg %p245
        $region78: #{tpu_custom_call.1} parent=67 // pred_check_branch
          %1119 = sbr.rel (%p1117) target = $region80
        $region79: #{tpu_custom_call.1} parent=67 // pred_region
          %s1120 = sand.u32 %s30, 1
          %s1121 = scalar_lea.sflag [#allocation10], %s1120
          %s1122 = sand.u32 %s230, 1
          %s1123 = smul.addr %s1122, 16
          %s1124 = scalar_lea.vmem [#allocation11], %s1123
          %1125 = dma.done %s1121, 256
        $region80: #{tpu_custom_call.1} parent=67 // pred_fallthru
          _
      $region68: #{tpu_custom_call.1} parent=5 // pred_fallthru
        _
    $region6: #{tpu_custom_call.1} parent=1 // loop_footer
      %s28 = sadd.s32 1, %s24
    $region7: #{tpu_custom_call.1} parent=1 // loop_footer_branch
      %23 = sbr.rel target = $region3
    $region8: #{tpu_custom_call.1} parent=1 // loop_exit
      _
    %1126 = vsyncpa [#allocation3], 1
    %s1127 = scalar_lea.sflag [#allocation3], 1
    %1128 = vsyncpa %s1127, 1
    %1129 = vsyncpa [#allocation6], 1
    %1130 = vsyncpa [#allocation4], 1
    %s1131 = scalar_lea.sflag [#allocation4], 1
    %1132 = vsyncpa %s1131, 1
    %1133 = vsyncpa [#allocation10], 1
    %s1134 = scalar_lea.sflag [#allocation10], 1
    %1135 = vsyncpa %s1134, 1

</llo_original>
